<compile_context>
chip_gen: v6e
topology: v6e:2x2x1
jax: 0.10.0
libtpu: 0.0.40
codegen_flags: <defaults>
</compile_context>

<pallas_src>
import functools

import jax
import jax.numpy as jnp
from jax.experimental import pallas as pl
from jax.experimental.pallas import tpu as pltpu


# ----------------------------------------------------------------------------
# pltpu.roll direction probe.  MUST be called eagerly (outside jit); the result
# is passed to rir_forward as a static bool, so the kernel is correct under
# either rotate convention of the hardware roll primitive.
# ----------------------------------------------------------------------------
def probe_roll_matches_numpy() -> bool:
    """True iff pltpu.roll(x, s, a) == np.roll(x, s, a), i.e. result[i] = x[i-s]."""
    def k(x_ref, o_ref):
        o_ref[...] = pltpu.roll(x_ref[...], 1, 1)

    x = jnp.tile(jnp.arange(128, dtype=jnp.float32)[None, :], (8, 1))
    y = pl.pallas_call(k, out_shape=jax.ShapeDtypeStruct((8, 128), jnp.float32))(x)
    return bool(y[0, 0] == 127.0)


# ----------------------------------------------------------------------------
# The fused RiR kernel.  One grid step = one batch element; the full network
# (all RGs / RCABs / tail convs) is executed inside a single invocation with
# everything resident in VMEM.
# ----------------------------------------------------------------------------
def _rir_kernel(x_ref, mask_ref, w1_ref, w2_ref, tw_ref,
                f1wt_ref, f1b_ref, f2w_ref, f2b_ref,
                o_ref,
                h_ref, rg_ref, patch_ref,
                *, NG, NR, W, roll_np):
    C, HW = h_ref.shape
    Kp = patch_ref.shape[0]                     # 9*C + bias/pad rows (8-aligned)
    taps = [(dy - 1, dx - 1) for dy in range(3) for dx in range(3)]

    def conv3x3(x, w_aug):
        """'SAME' 3x3 conv in (C, HW) layout: in-VMEM im2col + ONE MXU matmul.

        Bias is folded in: patch rows [9C, Kp) are constant ones and the packed
        weight carries the bias (then zeros) in those columns."""
        for i, (oy, ox) in enumerate(taps):
            delta = oy * W + ox                 # flat offset of the (oy, ox) tap
            if delta == 0:
                patch_ref[i * C:(i + 1) * C, :] = x
            else:
                amt = (-delta) % HW if roll_np else delta % HW
                shifted = pltpu.roll(x, amt, 1)            # XLU lane rotation
                # zero the taps that fall outside the image / wrapped rows
                patch_ref[i * C:(i + 1) * C, :] = shifted * mask_ref[i:i + 1, :]
        # (C, Kp) @ (Kp, HW) -> (C, HW), f32 accumulate on the MXU
        return jnp.dot(w_aug, patch_ref[...], preferred_element_type=jnp.float32)

    # ---- one-time (per batch element) init -----------------------------------
    patch_ref[9 * C:, :] = jnp.ones((Kp - 9 * C, HW), jnp.float32)  # bias rows
    h_ref[...] = x_ref[...]                                          # running act

    # ---- residual groups ------------------------------------------------------
    for g in range(NG):
        rg_ref[...] = h_ref[...]                # RG-entry snapshot

        def rcab_body(i, carry, g=g):
            idx = g * NR + i                    # stacked-weight index of this RCAB
            x0 = h_ref[...]
            h1 = jnp.maximum(conv3x3(x0, w1_ref[idx]), 0.0)
            h2 = conv3x3(h1, w2_ref[idx])
            # Squeeze-Excitation: mean -> fc1 -> ReLU -> fc2 -> sigmoid scale
            pooled = jnp.mean(h2, axis=1, keepdims=True)                  # (C, 1)
            s1 = jnp.sum(f1wt_ref[idx] * pooled, axis=0, keepdims=True)   # (1, Cr)
            s1 = jnp.maximum(s1 + f1b_ref[idx], 0.0)
            s2 = jnp.sum(f2w_ref[idx] * s1, axis=1, keepdims=True) + f2b_ref[idx]
            h_ref[...] = h2 * jax.nn.sigmoid(s2) + x0                     # + skip
            return carry

        jax.lax.fori_loop(0, NR, rcab_body, 0, unroll=True)
        # trailing conv of the residual group + group skip
        h_ref[...] = conv3x3(h_ref[...], tw_ref[g]) + rg_ref[...]

    # ---- trailing RiR conv + outer skip -> output -----------------------------
    o_ref[...] = conv3x3(h_ref[...], tw_ref[NG]) + x_ref[...]


# ----------------------------------------------------------------------------
# Host-side packing: weights stacked per stage, bias folded, masks precomputed.
# ----------------------------------------------------------------------------
def _pack_conv(w, b):
    """(Cout,Cin,3,3),(Cout,) -> (Cout, Kp): im2col column order (ky*3+kx)*Cin+ci,
    bias in column 9*Cin, zero padding up to a multiple of 8."""
    cout, cin = w.shape[0], w.shape[1]
    kc = 9 * cin + 1
    kp = ((kc + 7) // 8) * 8
    w_re = jnp.transpose(w, (0, 2, 3, 1)).reshape(cout, 9 * cin)
    pad = jnp.zeros((cout, kp - kc), jnp.float32)
    return jnp.concatenate([w_re, b.reshape(cout, 1), pad], axis=1)


def pack_params(params):
    rcabs = [rc for g in params["rgs"] for rc in g["rcabs"]]
    w1 = jnp.stack([_pack_conv(rc["conv1_w"], rc["conv1_b"]) for rc in rcabs])
    w2 = jnp.stack([_pack_conv(rc["conv2_w"], rc["conv2_b"]) for rc in rcabs])
    f1wt = jnp.stack([rc["fc1_w"].T for rc in rcabs])                 # (NT, C, Cr)
    f1b = jnp.stack([rc["fc1_b"].reshape(1, -1) for rc in rcabs])     # (NT, 1, Cr)
    f2w = jnp.stack([rc["fc2_w"] for rc in rcabs])                    # (NT, C, Cr)
    f2b = jnp.stack([rc["fc2_b"].reshape(-1, 1) for rc in rcabs])     # (NT, C, 1)
    tails = [(g["conv_w"], g["conv_b"]) for g in params["rgs"]]
    tails.append((params["conv_w"], params["conv_b"]))                # RiR tail last
    tw = jnp.stack([_pack_conv(w, b) for (w, b) in tails])            # (NG+1, C, Kp)
    return dict(w1=w1, w2=w2, tw=tw, f1wt=f1wt, f1b=f1b, f2w=f2w, f2b=f2b)


def _halo_masks(H, W):
    """(9, H*W) f32: mask[(dy*3+dx), p] = 1 iff tap (dy-1, dx-1) at pixel p is
    inside the image (zero-padding of the 'SAME' conv)."""
    HW = H * W
    pos = jnp.arange(HW, dtype=jnp.int32)
    py, px = pos // W, pos % W
    rows = []
    for dy in range(3):
        for dx in range(3):
            oy, ox = dy - 1, dx - 1
            ok = ((py + oy >= 0) & (py + oy < H) & (px + ox >= 0) & (px + ox < W))
            rows.append(ok.astype(jnp.float32))
    return jnp.stack(rows)


# ----------------------------------------------------------------------------
# Top-level forward: ONE pallas_call for the whole network, grid = (batch,).
# ----------------------------------------------------------------------------
def rir_forward(x, packed, *, num_RG, num_RCAB, roll_matches_numpy=True):
    B, C, H, W = x.shape
    HW = H * W
    NG, NR = num_RG, num_RCAB
    NT = NG * NR
    Kp = packed["w1"].shape[-1]
    Cr = packed["f1wt"].shape[-1]

    xf = x.reshape(B, C, HW).astype(jnp.float32)   # NCHW is already (C, HW)-major
    mask = _halo_masks(H, W)                       # (9, HW), VMEM-resident

    kernel = functools.partial(_rir_kernel, NG=NG, NR=NR, W=W,
                               roll_np=roll_matches_numpy)

    x_map = lambda b: (b, 0, 0)
    c3 = lambda b: (0, 0, 0)                       # resident (never re-fetched)
    c2 = lambda b: (0, 0)

    n_conv = 2 * NT + NG + 1
    param_bytes = sum(int(v.size) * 4 for v in packed.values())
    cost = pl.CostEstimate(
        flops=int(2 * B * HW * C * n_conv * Kp + 6 * B * NT * C * Cr),
        transcendentals=int(B * NT * C),
        bytes_accessed=int(2 * B * C * HW * 4 + param_bytes + 9 * HW * 4))

    y = pl.pallas_call(
        kernel,
        out_shape=jax.ShapeDtypeStruct((B, C, HW), jnp.float32),
        grid=(B,),
        in_specs=[
            pl.BlockSpec((None, C, HW), x_map),    # input image (resident for skips)
            pl.BlockSpec((9, HW), c2),             # halo masks
            pl.BlockSpec((NT, C, Kp), c3),         # RCAB conv1 (bias folded)
            pl.BlockSpec((NT, C, Kp), c3),         # RCAB conv2 (bias folded)
            pl.BlockSpec((NG + 1, C, Kp), c3),     # RG tails + RiR tail (bias folded)
            pl.BlockSpec((NT, C, Cr), c3),         # SE fc1 weight (transposed)
            pl.BlockSpec((NT, 1, Cr), c3),         # SE fc1 bias
            pl.BlockSpec((NT, C, Cr), c3),         # SE fc2 weight
            pl.BlockSpec((NT, C, 1), c3),          # SE fc2 bias
        ],
        out_specs=pl.BlockSpec((None, C, HW), x_map),
        scratch_shapes=[
            pltpu.VMEM((C, HW), jnp.float32),      # running activation h
            pltpu.VMEM((C, HW), jnp.float32),      # RG-entry snapshot
            pltpu.VMEM((Kp, HW), jnp.float32),     # im2col patch (+ constant rows)
        ],
        compiler_params=pltpu.CompilerParams(
            dimension_semantics=("parallel",)),    # batch across TCs on v7x
        cost_estimate=cost,
    )(xf, mask, packed["w1"], packed["w2"], packed["tw"],
      packed["f1wt"], packed["f1b"], packed["f2w"], packed["f2b"])
    return y.reshape(B, C, H, W)


# ----------------------------------------------------------------------------
# Deterministic synthetic parameters (PyTorch-style layouts: OIHW conv, (out,in) fc)
# ----------------------------------------------------------------------------
def init_params(key, C, r, num_RG=3, num_RCAB=3):
    Cr = max(C // r, 1)

    def conv_init(k, cin, cout, ksz=3):
        kw, kb = jax.random.split(k)
        w = jax.random.normal(kw, (cout, cin, ksz, ksz), jnp.float32) / jnp.sqrt(
            jnp.float32(cin * ksz * ksz))
        b = 0.01 * jax.random.normal(kb, (cout,), jnp.float32)
        return w, b

    def fc_init(k, cin, cout):
        kw, kb = jax.random.split(k)
        w = jax.random.normal(kw, (cout, cin), jnp.float32) / jnp.sqrt(jnp.float32(cin))
        b = 0.01 * jax.random.normal(kb, (cout,), jnp.float32)
        return w, b

    rgs = []
    for _ in range(num_RG):
        rcabs = []
        for _ in range(num_RCAB):
            key, k1, k2, k3, k4 = jax.random.split(key, 5)
            c1w, c1b = conv_init(k1, C, C)
            c2w, c2b = conv_init(k2, C, C)
            f1w, f1b = fc_init(k3, C, Cr)
            f2w, f2b = fc_init(k4, Cr, C)
            rcabs.append(dict(conv1_w=c1w, conv1_b=c1b, conv2_w=c2w, conv2_b=c2b,
                              fc1_w=f1w, fc1_b=f1b, fc2_w=f2w, fc2_b=f2b))
        key, kc = jax.random.split(key)
        cw, cb = conv_init(kc, C, C)
        rgs.append(dict(rcabs=rcabs, conv_w=cw, conv_b=cb))
    key, kc = jax.random.split(key)
    cw, cb = conv_init(kc, C, C)
    return dict(rgs=rgs, conv_w=cw, conv_b=cb)


# ----------------------------------------------------------------------------
# Pure-JAX reference (NCHW) for correctness checking
# ----------------------------------------------------------------------------
def _conv_ref(x, w, b):
    y = jax.lax.conv_general_dilated(
        x, w, window_strides=(1, 1), padding="SAME",
        dimension_numbers=("NCHW", "OIHW", "NCHW"))
    return y + b.reshape(1, -1, 1, 1)


def _rcab_ref(x, p):
    h = jnp.maximum(_conv_ref(x, p["conv1_w"], p["conv1_b"]), 0.0)
    h = _conv_ref(h, p["conv2_w"], p["conv2_b"])
    pooled = jnp.mean(h, axis=(2, 3))                                  # (B, C)
    s = jnp.maximum(pooled @ p["fc1_w"].T + p["fc1_b"], 0.0)
    s = jax.nn.sigmoid(s @ p["fc2_w"].T + p["fc2_b"])
    return h * s[:, :, None, None] + x


def rir_ref(x, params):
    def rg(xg, p):
        h = xg
        for rp in p["rcabs"]:
            h = _rcab_ref(h, rp)
        return xg + _conv_ref(h, p["conv_w"], p["conv_b"])

    h = x
    for gp in params["rgs"]:
        h = rg(h, gp)
    return x + _conv_ref(h, params["conv_w"], params["conv_b"])


# ----------------------------------------------------------------------------
if __name__ == "__main__":
    key = jax.random.PRNGKey(0)
    kx, kp = jax.random.split(key)

    B, C, H, W = 2, 8, 16, 16        # NCHW input, matching the PyTorch module
    r = 4
    NG, NR = 3, 3

    x = jax.random.normal(kx, (B, C, H, W), jnp.float32)
    params = init_params(kp, C, r, num_RG=NG, num_RCAB=NR)
    packed = pack_params(params)

    # Resolve the roll-direction convention EAGERLY, pass it as a static arg.
    roll_np = probe_roll_matches_numpy()

    fwd = jax.jit(functools.partial(rir_forward, num_RG=NG, num_RCAB=NR,
                                    roll_matches_numpy=roll_np))
    y = jax.block_until_ready(fwd(x, packed))

    y_ref = jax.block_until_ready(rir_ref(x, params))
    assert y.shape == (B, C, H, W), y.shape
    max_err = float(jnp.max(jnp.abs(y - y_ref)))
    assert max_err < 2e-3, f"max abs err {max_err}"

    print("KERNEL_OK")
</pallas_src>

<mosaic_0001>
module attributes {stable_mosaic.version = 11 : i64} {
  func.func @k(%arg0: memref<8x128xf32, #tpu.memory_space<vmem>>, %arg1: memref<8x128xf32, #tpu.memory_space<vmem>>) attributes {dimension_semantics = [], scalar_prefetch = 0 : i64, scratch_operands = 0 : i64, tpu.core_type = #tpu.core_type<tc>} {
    %c0 = arith.constant 0 : index
    %c0_0 = arith.constant 0 : index
    %0 = vector.load %arg0[%c0, %c0_0] : memref<8x128xf32, #tpu.memory_space<vmem>>, vector<8x128xf32>
    %c1_i32 = arith.constant 1 : i32
    %1 = tpu.dynamic_rotate %0 by %c1_i32 dim 1 : vector<8x128xf32>, i32 -> vector<8x128xf32>
    %c0_1 = arith.constant 0 : index
    %c0_2 = arith.constant 0 : index
    %2 = vector.load %arg1[%c0_1, %c0_2] : memref<8x128xf32, #tpu.memory_space<vmem>>, vector<8x128xf32>
    tpu.vector_store %arg1[%c0_1, %c0_2], %1 {strides = array<i32>} : memref<8x128xf32, #tpu.memory_space<vmem>>, vector<8x128xf32>,
    return
  }
}

</mosaic_0001>

<llo_original>
// kernel: tpu_custom_call.1
$region0: #{tpu_custom_call.1}
  #allocation0 [shape = 'u32[]', space=smem, size = 0x4, offset = 0x4, fixed_abs, tag = 'smem constant byte address 0x4 - core index']
  #allocation1 [shape = 'u32[144,128]{1,0:T(1,128)}', space=vmem, size = 0x12000, scoped, tag = 'internal scratch']
  %s0 = inlined_call_operand.hbm [shape: f32[8,128], index: 0, kind: input, shape index: {}]
  %s1 = inlined_call_operand.hbm [shape: f32[8,128], index: 1, kind: output, shape index: {}]
  %s2 = sld [smem:[#allocation0]]
  $region18: #{tpu_custom_call.1} parent=0
    _
  %s4 = ssub.s32 1, %s2
  %s5 = scalar_select 0, %s4, %s2
  $region1: #{tpu_custom_call.1} parent=0
    #allocation2 [shape = 'u8[4096]{0}', space=vmem, size = 0x1000, scoped, tag = 'input window, operand 0, single buffered']
    #allocation3 [shape = 's32[1]{0}', space=sflag, size = 0x4, scoped, tag = 'scoped memory for tpu_custom_call.1']
    #allocation4 [shape = 's32[1]{0}', space=sflag, size = 0x4, scoped, tag = 'scoped memory for tpu_custom_call.1']
    #allocation5 [shape = 'u8[4096]{0}', space=vmem, size = 0x1000, scoped, tag = 'output window, operand 0, single buffered']
    %6 = vsyncpa [#allocation3], 0
    %7 = vsyncpa [#allocation4], 0
    // Predicated region
    $region2: #{tpu_custom_call.1} parent=1 // pred_check
      _
    $region3: #{tpu_custom_call.1} parent=1 // pred_check_branch
      %9 = sbr.rel (0) target = $region5
    $region4: #{tpu_custom_call.1} parent=1 // pred_region
      %s11 = ssub.s32 128, 128
      %12 = vsyncadd [#allocation3], %s11
      %s14 = sshll.u32 [#allocation2], 4
      %s15 = int_to_ptr.vmem [resolvable:$true] %s14
      %17 = dma.hbm_to_vmem [thread:$0]  %s0, 128, %s15, [#allocation3]
    $region5: #{tpu_custom_call.1} parent=1 // pred_fallthru
      _
    // Predicated region
    $region6: #{tpu_custom_call.1} parent=1 // pred_check
      _
    $region7: #{tpu_custom_call.1} parent=1 // pred_check_branch
      %19 = sbr.rel (0) target = $region9
    $region8: #{tpu_custom_call.1} parent=1 // pred_region
      %20 = dma.done [#allocation3], 128
    $region9: #{tpu_custom_call.1} parent=1 // pred_fallthru
      _
    %v21 = vld [vmem:[#allocation2] sm:$0xff]
    %22 = vrot.lane.b32.xlu0 %v21, 1
    %v23 = vpop.permute.xlu0 %22
    %24 = vst [vmem:[#allocation5] sm:$0xff] %v23
    // Predicated region
    $region10: #{tpu_custom_call.1} parent=1 // pred_check
      _
    $region11: #{tpu_custom_call.1} parent=1 // pred_check_branch
      %26 = sbr.rel (0) target = $region13
    $region12: #{tpu_custom_call.1} parent=1 // pred_region
      %s28 = ssub.s32 128, 128
      %29 = vsyncadd [#allocation4], %s28
      %s31 = sshll.u32 [#allocation5], 4
      %s32 = int_to_ptr.vmem [resolvable:$true] %s31
      %34 = dma.vmem_to_hbm [thread:$0]  %s32, 128, %s1, [#allocation4]
    $region13: #{tpu_custom_call.1} parent=1 // pred_fallthru
      _
    // Predicated region
    $region14: #{tpu_custom_call.1} parent=1 // pred_check
      _
    $region15: #{tpu_custom_call.1} parent=1 // pred_check_branch
      %36 = sbr.rel (0) target = $region17
    $region16: #{tpu_custom_call.1} parent=1 // pred_region
      %37 = dma.done [#allocation4], 128
    $region17: #{tpu_custom_call.1} parent=1 // pred_fallthru
      _
    %38 = vsyncpa [#allocation3], 1
    %39 = vsyncpa [#allocation4], 1

</llo_original>
